<compile_context>
chip_gen: v6e
topology: v6e:2x2x1
jax: 0.10.0
libtpu: 0.0.40
codegen_flags: <defaults>
</compile_context>

<pallas_src>
import jax
import jax.numpy as jnp
from jax.experimental import pallas as pl
from jax.experimental.pallas import tpu as pltpu

LANE = 128


def _sdg_kernel(x_ref, w1_ref, b1_ref, w2_ref, b2_ref, o_ref):
    # x_ref : (TB, Cin,  TILE_R, 128)  VMEM f32  (pixels dense on sublanes+lanes)
    # w1_ref: (Cin, MID)               SMEM f32
    # b1_ref: (MID,)                   SMEM f32
    # w2_ref: (MID, Cout)              SMEM f32
    # b2_ref: (Cout,)                  SMEM f32
    # o_ref : (TB, Cout, TILE_R, 128)  VMEM f32
    cin = x_ref.shape[1]
    mid = w1_ref.shape[1]
    cout = o_ref.shape[1]

    # Per-channel dense slabs, loaded once.
    x_ch = [x_ref[:, ci, :, :] for ci in range(cin)]          # each (TB, TILE_R, 128)

    # conv1 (1x1) + ReLU: unrolled VPU FMAs with SMEM scalar weights.
    h = []
    for m in range(mid):
        acc = x_ch[0] * w1_ref[0, m]
        for ci in range(1, cin):
            acc = acc + x_ch[ci] * w1_ref[ci, m]
        h.append(jnp.maximum(acc + b1_ref[m], 0.0))           # (TB, TILE_R, 128)

    # conv2 (1x1): store each output channel directly (no concatenate).
    for co in range(cout):
        y = h[0] * w2_ref[0, co]
        for m in range(1, mid):
            y = y + h[m] * w2_ref[m, co]
        o_ref[:, co, :, :] = (y + b2_ref[co]).astype(o_ref.dtype)


def sdg_forward(x_nchw, w1, b1, w2, b2, *, target_rows=1024):
    """x_nchw: (B, Cin, H, W) float32.  Returns (B, Cout, H, W).

    w1: (Cin, MID), b1: (MID,), w2: (MID, Cout), b2: (Cout,)  — all float32.
    """
    B, Cin, H, W = x_nchw.shape
    MID = w1.shape[1]
    Cout = w2.shape[1]
    P = H * W

    # Free, contiguous reshape to (B, Cin, R, 128).  Padding only in the rare
    # case H*W is not a multiple of 128.
    R = pl.cdiv(P, LANE)
    P_pad = R * LANE
    x = x_nchw.reshape(B, Cin, P)
    if P_pad != P:
        x = jnp.pad(x, ((0, 0), (0, 0), (0, P_pad - P)))
    x = x.reshape(B, Cin, R, LANE)

    # ---- tile selection -----------------------------------------------------
    # Pixel tile: large (TILE_R=1024 -> 131072 px, ~7 MiB with double buffering,
    # fits default scoped VMEM on v5e/v6e/v7x).  Must be a multiple of 8
    # sublanes unless it spans the full row axis.
    if R <= target_rows:
        tile_r = R
    else:
        tile_r = max(8, (target_rows // 8) * 8)
    r_blocks = pl.cdiv(R, tile_r)

    # Batch tile: when the whole pixel axis fits in one block (small images),
    # block several batch elements per grid step so each step still moves
    # a meaningful amount of HBM, but keep >=2 grid steps when possible so
    # both v7x TensorCores are fed.
    if r_blocks == 1:
        tb = max(1, min(B, target_rows // max(R, 1)))
        if tb >= B and B >= 2:
            tb = (B + 1) // 2
    else:
        tb = 1
    b_blocks = pl.cdiv(B, tb)

    # If the grid still collapsed to a single step (B == 1, small image) but the
    # pixel axis is splittable, split it in two for the second TensorCore.
    if b_blocks * r_blocks == 1 and R >= 16:
        tile_r = ((pl.cdiv(R, 2) + 7) // 8) * 8
        r_blocks = pl.cdiv(R, tile_r)

    grid = (b_blocks, r_blocks)

    flops = 2 * B * P * (Cin * MID + MID * Cout)
    bytes_accessed = (B * Cin * P + B * Cout * P
                      + w1.size + b1.size + w2.size + b2.size) * 4

    out = pl.pallas_call(
        _sdg_kernel,
        out_shape=jax.ShapeDtypeStruct((B, Cout, R, LANE), x_nchw.dtype),
        grid_spec=pltpu.PrefetchScalarGridSpec(
            num_scalar_prefetch=0,
            grid=grid,
            in_specs=[
                pl.BlockSpec((tb, Cin, tile_r, LANE), lambda b, r: (b, 0, r, 0)),
                pl.BlockSpec(memory_space=pltpu.MemorySpace.SMEM),   # w1
                pl.BlockSpec(memory_space=pltpu.MemorySpace.SMEM),   # b1
                pl.BlockSpec(memory_space=pltpu.MemorySpace.SMEM),   # w2
                pl.BlockSpec(memory_space=pltpu.MemorySpace.SMEM),   # b2
            ],
            out_specs=pl.BlockSpec((tb, Cout, tile_r, LANE),
                                   lambda b, r: (b, 0, r, 0)),
        ),
        compiler_params=pltpu.CompilerParams(
            dimension_semantics=("parallel", "parallel")),
        cost_estimate=pl.CostEstimate(
            flops=flops, transcendentals=0, bytes_accessed=bytes_accessed),
    )(x, w1, b1, w2, b2)

    out = out.reshape(B, Cout, P_pad)
    if P_pad != P:
        out = out[:, :, :P]
    return out.reshape(B, Cout, H, W)


def init_sdg_params(key, input_channel, output_channel, middle=5):
    """Deterministic parameter init mirroring nn.Conv2d default (kaiming-uniform-ish)."""
    k1, k2, k3, k4 = jax.random.split(key, 4)
    bound1 = 1.0 / jnp.sqrt(float(input_channel))
    w1 = jax.random.uniform(k1, (input_channel, middle), jnp.float32,
                            minval=-bound1, maxval=bound1)
    b1 = jax.random.uniform(k2, (middle,), jnp.float32,
                            minval=-bound1, maxval=bound1)
    bound2 = 1.0 / jnp.sqrt(float(middle))
    w2 = jax.random.uniform(k3, (middle, output_channel), jnp.float32,
                            minval=-bound2, maxval=bound2)
    b2 = jax.random.uniform(k4, (output_channel,), jnp.float32,
                            minval=-bound2, maxval=bound2)
    return w1, b1, w2, b2


def sdg_reference(x_nchw, w1, b1, w2, b2):
    """Plain-JAX reference of the PyTorch forward for validation."""
    x = jnp.transpose(x_nchw, (0, 2, 3, 1))            # NHWC
    h = jnp.maximum(x @ w1 + b1, 0.0)
    y = h @ w2 + b2
    return jnp.transpose(y, (0, 3, 1, 2))              # NCHW


if __name__ == "__main__":
    key = jax.random.PRNGKey(0)
    k_x, k_p = jax.random.split(key)

    B, Cin, H, W = 2, 4, 16, 16
    Cout = 3

    x = jax.random.normal(k_x, (B, Cin, H, W), jnp.float32)
    w1, b1, w2, b2 = init_sdg_params(k_p, Cin, Cout)

    out = sdg_forward(x, w1, b1, w2, b2)
    out = jax.block_until_ready(out)

    ref = sdg_reference(x, w1, b1, w2, b2)
    assert out.shape == (B, Cout, H, W)
    assert jnp.allclose(out, ref, atol=1e-5, rtol=1e-5)

    print("KERNEL_OK")
</pallas_src>

<mosaic_0001>
module attributes {stable_mosaic.version = 11 : i64} {
  func.func @_sdg_kernel(%arg0: i32, %arg1: i32, %arg2: memref<1x4x2x128xf32, #tpu.memory_space<vmem>>, %arg3: memref<4x5xf32, #tpu.memory_space<smem>>, %arg4: memref<5xf32, #tpu.memory_space<smem>>, %arg5: memref<5x3xf32, #tpu.memory_space<smem>>, %arg6: memref<3xf32, #tpu.memory_space<smem>>, %arg7: memref<1x3x2x128xf32, #tpu.memory_space<vmem>>) attributes {dimension_semantics = [#tpu.dimension_semantics<parallel>, #tpu.dimension_semantics<parallel>], iteration_bounds = array<i64: 2, 1>, scalar_prefetch = 0 : i64, scratch_operands = 0 : i64, tpu.core_type = #tpu.core_type<tc>, window_params = [{transform_indices = @transform_0, window_bounds = array<i64: 1, 4, 2, 128>}, {transform_indices = @transform_1, window_bounds = array<i64: 4, 5>}, {transform_indices = @transform_2, window_bounds = array<i64: 5>}, {transform_indices = @transform_3, window_bounds = array<i64: 5, 3>}, {transform_indices = @transform_4, window_bounds = array<i64: 3>}, {transform_indices = @transform_5, window_bounds = array<i64: 1, 3, 2, 128>}]} {
    %c0 = arith.constant 0 : index
    %c0_0 = arith.constant 0 : index
    %c0_1 = arith.constant 0 : index
    %c0_2 = arith.constant 0 : index
    %0 = vector.load %arg2[%c0, %c0_0, %c0_1, %c0_2] : memref<1x4x2x128xf32, #tpu.memory_space<vmem>>, vector<1x1x2x128xf32>
    %1 = vector.shape_cast %0 : vector<1x1x2x128xf32> to vector<1x2x128xf32>
    %c0_3 = arith.constant 0 : index
    %c1 = arith.constant 1 : index
    %c0_4 = arith.constant 0 : index
    %c0_5 = arith.constant 0 : index
    %2 = vector.load %arg2[%c0_3, %c1, %c0_4, %c0_5] : memref<1x4x2x128xf32, #tpu.memory_space<vmem>>, vector<1x1x2x128xf32>
    %3 = vector.shape_cast %2 : vector<1x1x2x128xf32> to vector<1x2x128xf32>
    %c0_6 = arith.constant 0 : index
    %c2 = arith.constant 2 : index
    %c0_7 = arith.constant 0 : index
    %c0_8 = arith.constant 0 : index
    %4 = vector.load %arg2[%c0_6, %c2, %c0_7, %c0_8] : memref<1x4x2x128xf32, #tpu.memory_space<vmem>>, vector<1x1x2x128xf32>
    %5 = vector.shape_cast %4 : vector<1x1x2x128xf32> to vector<1x2x128xf32>
    %c0_9 = arith.constant 0 : index
    %c3 = arith.constant 3 : index
    %c0_10 = arith.constant 0 : index
    %c0_11 = arith.constant 0 : index
    %6 = vector.load %arg2[%c0_9, %c3, %c0_10, %c0_11] : memref<1x4x2x128xf32, #tpu.memory_space<vmem>>, vector<1x1x2x128xf32>
    %7 = vector.shape_cast %6 : vector<1x1x2x128xf32> to vector<1x2x128xf32>
    %c0_12 = arith.constant 0 : index
    %c0_13 = arith.constant 0 : index
    %8 = memref.load %arg3[%c0_12, %c0_13] : memref<4x5xf32, #tpu.memory_space<smem>>
    %9 = vector.broadcast %8 : f32 to vector<1x2x128xf32>
    %10 = arith.mulf %1, %9 : vector<1x2x128xf32>
    %c1_14 = arith.constant 1 : index
    %c0_15 = arith.constant 0 : index
    %11 = memref.load %arg3[%c1_14, %c0_15] : memref<4x5xf32, #tpu.memory_space<smem>>
    %12 = vector.broadcast %11 : f32 to vector<1x2x128xf32>
    %13 = arith.mulf %3, %12 : vector<1x2x128xf32>
    %14 = arith.addf %10, %13 : vector<1x2x128xf32>
    %c2_16 = arith.constant 2 : index
    %c0_17 = arith.constant 0 : index
    %15 = memref.load %arg3[%c2_16, %c0_17] : memref<4x5xf32, #tpu.memory_space<smem>>
    %16 = vector.broadcast %15 : f32 to vector<1x2x128xf32>
    %17 = arith.mulf %5, %16 : vector<1x2x128xf32>
    %18 = arith.addf %14, %17 : vector<1x2x128xf32>
    %c3_18 = arith.constant 3 : index
    %c0_19 = arith.constant 0 : index
    %19 = memref.load %arg3[%c3_18, %c0_19] : memref<4x5xf32, #tpu.memory_space<smem>>
    %20 = vector.broadcast %19 : f32 to vector<1x2x128xf32>
    %21 = arith.mulf %7, %20 : vector<1x2x128xf32>
    %22 = arith.addf %18, %21 : vector<1x2x128xf32>
    %c0_20 = arith.constant 0 : index
    %23 = memref.load %arg4[%c0_20] : memref<5xf32, #tpu.memory_space<smem>>
    %24 = vector.broadcast %23 : f32 to vector<1x2x128xf32>
    %25 = arith.addf %22, %24 : vector<1x2x128xf32>
    %cst = arith.constant 0.000000e+00 : f32
    %26 = vector.broadcast %cst : f32 to vector<1x2x128xf32>
    %27 = arith.maximumf %25, %26 : vector<1x2x128xf32>
    %c0_21 = arith.constant 0 : index
    %c1_22 = arith.constant 1 : index
    %28 = memref.load %arg3[%c0_21, %c1_22] : memref<4x5xf32, #tpu.memory_space<smem>>
    %29 = vector.broadcast %28 : f32 to vector<1x2x128xf32>
    %30 = arith.mulf %1, %29 : vector<1x2x128xf32>
    %c1_23 = arith.constant 1 : index
    %c1_24 = arith.constant 1 : index
    %31 = memref.load %arg3[%c1_23, %c1_24] : memref<4x5xf32, #tpu.memory_space<smem>>
    %32 = vector.broadcast %31 : f32 to vector<1x2x128xf32>
    %33 = arith.mulf %3, %32 : vector<1x2x128xf32>
    %34 = arith.addf %30, %33 : vector<1x2x128xf32>
    %c2_25 = arith.constant 2 : index
    %c1_26 = arith.constant 1 : index
    %35 = memref.load %arg3[%c2_25, %c1_26] : memref<4x5xf32, #tpu.memory_space<smem>>
    %36 = vector.broadcast %35 : f32 to vector<1x2x128xf32>
    %37 = arith.mulf %5, %36 : vector<1x2x128xf32>
    %38 = arith.addf %34, %37 : vector<1x2x128xf32>
    %c3_27 = arith.constant 3 : index
    %c1_28 = arith.constant 1 : index
    %39 = memref.load %arg3[%c3_27, %c1_28] : memref<4x5xf32, #tpu.memory_space<smem>>
    %40 = vector.broadcast %39 : f32 to vector<1x2x128xf32>
    %41 = arith.mulf %7, %40 : vector<1x2x128xf32>
    %42 = arith.addf %38, %41 : vector<1x2x128xf32>
    %c1_29 = arith.constant 1 : index
    %43 = memref.load %arg4[%c1_29] : memref<5xf32, #tpu.memory_space<smem>>
    %44 = vector.broadcast %43 : f32 to vector<1x2x128xf32>
    %45 = arith.addf %42, %44 : vector<1x2x128xf32>
    %cst_30 = arith.constant 0.000000e+00 : f32
    %46 = vector.broadcast %cst_30 : f32 to vector<1x2x128xf32>
    %47 = arith.maximumf %45, %46 : vector<1x2x128xf32>
    %c0_31 = arith.constant 0 : index
    %c2_32 = arith.constant 2 : index
    %48 = memref.load %arg3[%c0_31, %c2_32] : memref<4x5xf32, #tpu.memory_space<smem>>
    %49 = vector.broadcast %48 : f32 to vector<1x2x128xf32>
    %50 = arith.mulf %1, %49 : vector<1x2x128xf32>
    %c1_33 = arith.constant 1 : index
    %c2_34 = arith.constant 2 : index
    %51 = memref.load %arg3[%c1_33, %c2_34] : memref<4x5xf32, #tpu.memory_space<smem>>
    %52 = vector.broadcast %51 : f32 to vector<1x2x128xf32>
    %53 = arith.mulf %3, %52 : vector<1x2x128xf32>
    %54 = arith.addf %50, %53 : vector<1x2x128xf32>
    %c2_35 = arith.constant 2 : index
    %c2_36 = arith.constant 2 : index
    %55 = memref.load %arg3[%c2_35, %c2_36] : memref<4x5xf32, #tpu.memory_space<smem>>
    %56 = vector.broadcast %55 : f32 to vector<1x2x128xf32>
    %57 = arith.mulf %5, %56 : vector<1x2x128xf32>
    %58 = arith.addf %54, %57 : vector<1x2x128xf32>
    %c3_37 = arith.constant 3 : index
    %c2_38 = arith.constant 2 : index
    %59 = memref.load %arg3[%c3_37, %c2_38] : memref<4x5xf32, #tpu.memory_space<smem>>
    %60 = vector.broadcast %59 : f32 to vector<1x2x128xf32>
    %61 = arith.mulf %7, %60 : vector<1x2x128xf32>
    %62 = arith.addf %58, %61 : vector<1x2x128xf32>
    %c2_39 = arith.constant 2 : index
    %63 = memref.load %arg4[%c2_39] : memref<5xf32, #tpu.memory_space<smem>>
    %64 = vector.broadcast %63 : f32 to vector<1x2x128xf32>
    %65 = arith.addf %62, %64 : vector<1x2x128xf32>
    %cst_40 = arith.constant 0.000000e+00 : f32
    %66 = vector.broadcast %cst_40 : f32 to vector<1x2x128xf32>
    %67 = arith.maximumf %65, %66 : vector<1x2x128xf32>
    %c0_41 = arith.constant 0 : index
    %c3_42 = arith.constant 3 : index
    %68 = memref.load %arg3[%c0_41, %c3_42] : memref<4x5xf32, #tpu.memory_space<smem>>
    %69 = vector.broadcast %68 : f32 to vector<1x2x128xf32>
    %70 = arith.mulf %1, %69 : vector<1x2x128xf32>
    %c1_43 = arith.constant 1 : index
    %c3_44 = arith.constant 3 : index
    %71 = memref.load %arg3[%c1_43, %c3_44] : memref<4x5xf32, #tpu.memory_space<smem>>
    %72 = vector.broadcast %71 : f32 to vector<1x2x128xf32>
    %73 = arith.mulf %3, %72 : vector<1x2x128xf32>
    %74 = arith.addf %70, %73 : vector<1x2x128xf32>
    %c2_45 = arith.constant 2 : index
    %c3_46 = arith.constant 3 : index
    %75 = memref.load %arg3[%c2_45, %c3_46] : memref<4x5xf32, #tpu.memory_space<smem>>
    %76 = vector.broadcast %75 : f32 to vector<1x2x128xf32>
    %77 = arith.mulf %5, %76 : vector<1x2x128xf32>
    %78 = arith.addf %74, %77 : vector<1x2x128xf32>
    %c3_47 = arith.constant 3 : index
    %c3_48 = arith.constant 3 : index
    %79 = memref.load %arg3[%c3_47, %c3_48] : memref<4x5xf32, #tpu.memory_space<smem>>
    %80 = vector.broadcast %79 : f32 to vector<1x2x128xf32>
    %81 = arith.mulf %7, %80 : vector<1x2x128xf32>
    %82 = arith.addf %78, %81 : vector<1x2x128xf32>
    %c3_49 = arith.constant 3 : index
    %83 = memref.load %arg4[%c3_49] : memref<5xf32, #tpu.memory_space<smem>>
    %84 = vector.broadcast %83 : f32 to vector<1x2x128xf32>
    %85 = arith.addf %82, %84 : vector<1x2x128xf32>
    %cst_50 = arith.constant 0.000000e+00 : f32
    %86 = vector.broadcast %cst_50 : f32 to vector<1x2x128xf32>
    %87 = arith.maximumf %85, %86 : vector<1x2x128xf32>
    %c0_51 = arith.constant 0 : index
    %c4 = arith.constant 4 : index
    %88 = memref.load %arg3[%c0_51, %c4] : memref<4x5xf32, #tpu.memory_space<smem>>
    %89 = vector.broadcast %88 : f32 to vector<1x2x128xf32>
    %90 = arith.mulf %1, %89 : vector<1x2x128xf32>
    %c1_52 = arith.constant 1 : index
    %c4_53 = arith.constant 4 : index
    %91 = memref.load %arg3[%c1_52, %c4_53] : memref<4x5xf32, #tpu.memory_space<smem>>
    %92 = vector.broadcast %91 : f32 to vector<1x2x128xf32>
    %93 = arith.mulf %3, %92 : vector<1x2x128xf32>
    %94 = arith.addf %90, %93 : vector<1x2x128xf32>
    %c2_54 = arith.constant 2 : index
    %c4_55 = arith.constant 4 : index
    %95 = memref.load %arg3[%c2_54, %c4_55] : memref<4x5xf32, #tpu.memory_space<smem>>
    %96 = vector.broadcast %95 : f32 to vector<1x2x128xf32>
    %97 = arith.mulf %5, %96 : vector<1x2x128xf32>
    %98 = arith.addf %94, %97 : vector<1x2x128xf32>
    %c3_56 = arith.constant 3 : index
    %c4_57 = arith.constant 4 : index
    %99 = memref.load %arg3[%c3_56, %c4_57] : memref<4x5xf32, #tpu.memory_space<smem>>
    %100 = vector.broadcast %99 : f32 to vector<1x2x128xf32>
    %101 = arith.mulf %7, %100 : vector<1x2x128xf32>
    %102 = arith.addf %98, %101 : vector<1x2x128xf32>
    %c4_58 = arith.constant 4 : index
    %103 = memref.load %arg4[%c4_58] : memref<5xf32, #tpu.memory_space<smem>>
    %104 = vector.broadcast %103 : f32 to vector<1x2x128xf32>
    %105 = arith.addf %102, %104 : vector<1x2x128xf32>
    %cst_59 = arith.constant 0.000000e+00 : f32
    %106 = vector.broadcast %cst_59 : f32 to vector<1x2x128xf32>
    %107 = arith.maximumf %105, %106 : vector<1x2x128xf32>
    %c0_60 = arith.constant 0 : index
    %c0_61 = arith.constant 0 : index
    %108 = memref.load %arg5[%c0_60, %c0_61] : memref<5x3xf32, #tpu.memory_space<smem>>
    %109 = vector.broadcast %108 : f32 to vector<1x2x128xf32>
    %110 = arith.mulf %27, %109 : vector<1x2x128xf32>
    %c1_62 = arith.constant 1 : index
    %c0_63 = arith.constant 0 : index
    %111 = memref.load %arg5[%c1_62, %c0_63] : memref<5x3xf32, #tpu.memory_space<smem>>
    %112 = vector.broadcast %111 : f32 to vector<1x2x128xf32>
    %113 = arith.mulf %47, %112 : vector<1x2x128xf32>
    %114 = arith.addf %110, %113 : vector<1x2x128xf32>
    %c2_64 = arith.constant 2 : index
    %c0_65 = arith.constant 0 : index
    %115 = memref.load %arg5[%c2_64, %c0_65] : memref<5x3xf32, #tpu.memory_space<smem>>
    %116 = vector.broadcast %115 : f32 to vector<1x2x128xf32>
    %117 = arith.mulf %67, %116 : vector<1x2x128xf32>
    %118 = arith.addf %114, %117 : vector<1x2x128xf32>
    %c3_66 = arith.constant 3 : index
    %c0_67 = arith.constant 0 : index
    %119 = memref.load %arg5[%c3_66, %c0_67] : memref<5x3xf32, #tpu.memory_space<smem>>
    %120 = vector.broadcast %119 : f32 to vector<1x2x128xf32>
    %121 = arith.mulf %87, %120 : vector<1x2x128xf32>
    %122 = arith.addf %118, %121 : vector<1x2x128xf32>
    %c4_68 = arith.constant 4 : index
    %c0_69 = arith.constant 0 : index
    %123 = memref.load %arg5[%c4_68, %c0_69] : memref<5x3xf32, #tpu.memory_space<smem>>
    %124 = vector.broadcast %123 : f32 to vector<1x2x128xf32>
    %125 = arith.mulf %107, %124 : vector<1x2x128xf32>
    %126 = arith.addf %122, %125 : vector<1x2x128xf32>
    %c0_70 = arith.constant 0 : index
    %127 = memref.load %arg6[%c0_70] : memref<3xf32, #tpu.memory_space<smem>>
    %128 = vector.broadcast %127 : f32 to vector<1x2x128xf32>
    %129 = arith.addf %126, %128 : vector<1x2x128xf32>
    %c0_71 = arith.constant 0 : index
    %c0_72 = arith.constant 0 : index
    %c0_73 = arith.constant 0 : index
    %c0_74 = arith.constant 0 : index
    %130 = vector.load %arg7[%c0_71, %c0_72, %c0_73, %c0_74] : memref<1x3x2x128xf32, #tpu.memory_space<vmem>>, vector<1x1x2x128xf32>
    %131 = vector.shape_cast %130 : vector<1x1x2x128xf32> to vector<1x2x128xf32>
    %132 = vector.shape_cast %129 : vector<1x2x128xf32> to vector<1x1x2x128xf32>
    tpu.vector_store %arg7[%c0_71, %c0_72, %c0_73, %c0_74], %132 {strides = array<i32>} : memref<1x3x2x128xf32, #tpu.memory_space<vmem>>, vector<1x1x2x128xf32>,
    %c0_75 = arith.constant 0 : index
    %c1_76 = arith.constant 1 : index
    %133 = memref.load %arg5[%c0_75, %c1_76] : memref<5x3xf32, #tpu.memory_space<smem>>
    %134 = vector.broadcast %133 : f32 to vector<1x2x128xf32>
    %135 = arith.mulf %27, %134 : vector<1x2x128xf32>
    %c1_77 = arith.constant 1 : index
    %c1_78 = arith.constant 1 : index
    %136 = memref.load %arg5[%c1_77, %c1_78] : memref<5x3xf32, #tpu.memory_space<smem>>
    %137 = vector.broadcast %136 : f32 to vector<1x2x128xf32>
    %138 = arith.mulf %47, %137 : vector<1x2x128xf32>
    %139 = arith.addf %135, %138 : vector<1x2x128xf32>
    %c2_79 = arith.constant 2 : index
    %c1_80 = arith.constant 1 : index
    %140 = memref.load %arg5[%c2_79, %c1_80] : memref<5x3xf32, #tpu.memory_space<smem>>
    %141 = vector.broadcast %140 : f32 to vector<1x2x128xf32>
    %142 = arith.mulf %67, %141 : vector<1x2x128xf32>
    %143 = arith.addf %139, %142 : vector<1x2x128xf32>
    %c3_81 = arith.constant 3 : index
    %c1_82 = arith.constant 1 : index
    %144 = memref.load %arg5[%c3_81, %c1_82] : memref<5x3xf32, #tpu.memory_space<smem>>
    %145 = vector.broadcast %144 : f32 to vector<1x2x128xf32>
    %146 = arith.mulf %87, %145 : vector<1x2x128xf32>
    %147 = arith.addf %143, %146 : vector<1x2x128xf32>
    %c4_83 = arith.constant 4 : index
    %c1_84 = arith.constant 1 : index
    %148 = memref.load %arg5[%c4_83, %c1_84] : memref<5x3xf32, #tpu.memory_space<smem>>
    %149 = vector.broadcast %148 : f32 to vector<1x2x128xf32>
    %150 = arith.mulf %107, %149 : vector<1x2x128xf32>
    %151 = arith.addf %147, %150 : vector<1x2x128xf32>
    %c1_85 = arith.constant 1 : index
    %152 = memref.load %arg6[%c1_85] : memref<3xf32, #tpu.memory_space<smem>>
    %153 = vector.broadcast %152 : f32 to vector<1x2x128xf32>
    %154 = arith.addf %151, %153 : vector<1x2x128xf32>
    %c0_86 = arith.constant 0 : index
    %c1_87 = arith.constant 1 : index
    %c0_88 = arith.constant 0 : index
    %c0_89 = arith.constant 0 : index
    %155 = vector.load %arg7[%c0_86, %c1_87, %c0_88, %c0_89] : memref<1x3x2x128xf32, #tpu.memory_space<vmem>>, vector<1x1x2x128xf32>
    %156 = vector.shape_cast %155 : vector<1x1x2x128xf32> to vector<1x2x128xf32>
    %157 = vector.shape_cast %154 : vector<1x2x128xf32> to vector<1x1x2x128xf32>
    tpu.vector_store %arg7[%c0_86, %c1_87, %c0_88, %c0_89], %157 {strides = array<i32>} : memref<1x3x2x128xf32, #tpu.memory_space<vmem>>, vector<1x1x2x128xf32>,
    %c0_90 = arith.constant 0 : index
    %c2_91 = arith.constant 2 : index
    %158 = memref.load %arg5[%c0_90, %c2_91] : memref<5x3xf32, #tpu.memory_space<smem>>
    %159 = vector.broadcast %158 : f32 to vector<1x2x128xf32>
    %160 = arith.mulf %27, %159 : vector<1x2x128xf32>
    %c1_92 = arith.constant 1 : index
    %c2_93 = arith.constant 2 : index
    %161 = memref.load %arg5[%c1_92, %c2_93] : memref<5x3xf32, #tpu.memory_space<smem>>
    %162 = vector.broadcast %161 : f32 to vector<1x2x128xf32>
    %163 = arith.mulf %47, %162 : vector<1x2x128xf32>
    %164 = arith.addf %160, %163 : vector<1x2x128xf32>
    %c2_94 = arith.constant 2 : index
    %c2_95 = arith.constant 2 : index
    %165 = memref.load %arg5[%c2_94, %c2_95] : memref<5x3xf32, #tpu.memory_space<smem>>
    %166 = vector.broadcast %165 : f32 to vector<1x2x128xf32>
    %167 = arith.mulf %67, %166 : vector<1x2x128xf32>
    %168 = arith.addf %164, %167 : vector<1x2x128xf32>
    %c3_96 = arith.constant 3 : index
    %c2_97 = arith.constant 2 : index
    %169 = memref.load %arg5[%c3_96, %c2_97] : memref<5x3xf32, #tpu.memory_space<smem>>
    %170 = vector.broadcast %169 : f32 to vector<1x2x128xf32>
    %171 = arith.mulf %87, %170 : vector<1x2x128xf32>
    %172 = arith.addf %168, %171 : vector<1x2x128xf32>
    %c4_98 = arith.constant 4 : index
    %c2_99 = arith.constant 2 : index
    %173 = memref.load %arg5[%c4_98, %c2_99] : memref<5x3xf32, #tpu.memory_space<smem>>
    %174 = vector.broadcast %173 : f32 to vector<1x2x128xf32>
    %175 = arith.mulf %107, %174 : vector<1x2x128xf32>
    %176 = arith.addf %172, %175 : vector<1x2x128xf32>
    %c2_100 = arith.constant 2 : index
    %177 = memref.load %arg6[%c2_100] : memref<3xf32, #tpu.memory_space<smem>>
    %178 = vector.broadcast %177 : f32 to vector<1x2x128xf32>
    %179 = arith.addf %176, %178 : vector<1x2x128xf32>
    %c0_101 = arith.constant 0 : index
    %c2_102 = arith.constant 2 : index
    %c0_103 = arith.constant 0 : index
    %c0_104 = arith.constant 0 : index
    %180 = vector.load %arg7[%c0_101, %c2_102, %c0_103, %c0_104] : memref<1x3x2x128xf32, #tpu.memory_space<vmem>>, vector<1x1x2x128xf32>
    %181 = vector.shape_cast %180 : vector<1x1x2x128xf32> to vector<1x2x128xf32>
    %182 = vector.shape_cast %179 : vector<1x2x128xf32> to vector<1x1x2x128xf32>
    tpu.vector_store %arg7[%c0_101, %c2_102, %c0_103, %c0_104], %182 {strides = array<i32>} : memref<1x3x2x128xf32, #tpu.memory_space<vmem>>, vector<1x1x2x128xf32>,
    return
  }
  func.func @transform_0(%arg0: i32, %arg1: i32) -> (i32, i32, i32, i32) {
    %c0_i32 = arith.constant 0 : i32
    %c0_i32_0 = arith.constant 0 : i32
    %c0_i32_1 = arith.constant 0 : i32
    return %arg0, %c0_i32, %arg1, %c0_i32_0 : i32, i32, i32, i32
  }
  func.func @transform_1(%arg0: i32, %arg1: i32) -> (i32, i32) {
    %c0_i32 = arith.constant 0 : i32
    %c0_i32_0 = arith.constant 0 : i32
    %c0_i32_1 = arith.constant 0 : i32
    return %c0_i32, %c0_i32_0 : i32, i32
  }
  func.func @transform_2(%arg0: i32, %arg1: i32) -> i32 {
    %c0_i32 = arith.constant 0 : i32
    %c0_i32_0 = arith.constant 0 : i32
    return %c0_i32 : i32
  }
  func.func @transform_3(%arg0: i32, %arg1: i32) -> (i32, i32) {
    %c0_i32 = arith.constant 0 : i32
    %c0_i32_0 = arith.constant 0 : i32
    %c0_i32_1 = arith.constant 0 : i32
    return %c0_i32, %c0_i32_0 : i32, i32
  }
  func.func @transform_4(%arg0: i32, %arg1: i32) -> i32 {
    %c0_i32 = arith.constant 0 : i32
    %c0_i32_0 = arith.constant 0 : i32
    return %c0_i32 : i32
  }
  func.func @transform_5(%arg0: i32, %arg1: i32) -> (i32, i32, i32, i32) {
    %c0_i32 = arith.constant 0 : i32
    %c0_i32_0 = arith.constant 0 : i32
    %c0_i32_1 = arith.constant 0 : i32
    return %arg0, %c0_i32, %arg1, %c0_i32_0 : i32, i32, i32, i32
  }
}

</mosaic_0001>

<llo_original>
// kernel: tpu_custom_call.1
$region0: #{tpu_custom_call.1}
  #allocation0 [shape = 'u32[]', space=smem, size = 0x4, offset = 0x4, fixed_abs, tag = 'smem constant byte address 0x4 - core index']
  #allocation1 [shape = 'u32[144,128]{1,0:T(1,128)}', space=vmem, size = 0x12000, scoped, tag = 'internal scratch']
  %s0 = inlined_call_operand.hbm [shape: f32[2,4,2,128], index: 0, kind: input, shape index: {}]
  %s1 = inlined_call_operand.vmem [shape: f32[4,5], index: 1, kind: input, shape index: {}]
  %s2 = inlined_call_operand.vmem [shape: f32[5], index: 2, kind: input, shape index: {}]
  %s3 = inlined_call_operand.vmem [shape: f32[5,3], index: 3, kind: input, shape index: {}]
  %s4 = inlined_call_operand.vmem [shape: f32[3], index: 4, kind: input, shape index: {}]
  %s5 = inlined_call_operand.hbm [shape: f32[2,3,2,128], index: 5, kind: output, shape index: {}]
  %s6 = sld [smem:[#allocation0]]
  $region73: #{tpu_custom_call.1} parent=0
    _
  %s8 = ssub.s32 1, %s6
  %s9 = scalar_select 0, %s8, %s6
  $region1: #{tpu_custom_call.1} parent=0
    #allocation2 [shape = 'u8[8192]{0}', space=vmem, size = 0x2000, scoped, tag = 'input window, operand 0']
    #allocation3 [shape = 's32[2]{0}', space=sflag, size = 0x8, scoped, tag = 'scoped memory for tpu_custom_call.1']
    #allocation4 [shape = 's32[2]{0}', space=sflag, size = 0x8, scoped, tag = 'scoped memory for tpu_custom_call.1']
    #allocation5 [shape = 's32[2]{0}', space=sflag, size = 0x8, scoped, tag = 'scoped memory for tpu_custom_call.1']
    #allocation6 [shape = 'u8[2048]{0}', space=smem, size = 0x800, scoped, tag = 'input window, operand 1, single buffered']
    #allocation7 [shape = 'u8[512]{0}', space=smem, size = 0x200, scoped, tag = 'input window, operand 2, single buffered']
    #allocation8 [shape = 's32[1]{0}', space=sflag, size = 0x4, scoped, tag = 'scoped memory for tpu_custom_call.1']
    #allocation9 [shape = 'u8[4096]{0}', space=smem, size = 0x1000, scoped, tag = 'input window, operand 3, single buffered']
    #allocation10 [shape = 'u8[512]{0}', space=smem, size = 0x200, scoped, tag = 'input window, operand 4, single buffered']
    #allocation11 [shape = 's32[1]{0}', space=sflag, size = 0x4, scoped, tag = 'scoped memory for tpu_custom_call.1']
    #allocation12 [shape = 'u8[6144]{0}', space=vmem, size = 0x1800, scoped, tag = 'output window, operand 0']
    %10 = vsyncpa [#allocation3], 0
    %s11 = scalar_lea.sflag [#allocation3], 1
    %12 = vsyncpa %s11, 0
    %13 = vsyncpa [#allocation5], 0
    %14 = vsyncpa [#allocation8], 0
    %15 = vsyncpa [#allocation11], 0
    %16 = vsyncpa [#allocation4], 0
    %s17 = scalar_lea.sflag [#allocation4], 1
    %18 = vsyncpa %s17, 0
    loop: start=0, step=1, limit=4
    $region2: #{tpu_custom_call.1} parent=1 // loop_pre_header
      _
    $region3: #{tpu_custom_call.1} parent=1 // loop_header
      %s20 = sphi 0, %s24
      %p21 = scmp.ge.s32.totalorder %s20, 4
      %s27 = sphi 0, %s39
      %s28 = sphi 0, %s35
      %s29 = sphi 0, %s27
      %s30 = sphi 0, %s28
      %s31 = sphi 0, %s29
      %s32 = sphi 0, %s30
      %s44 = sphi 0, %s46
      %s47 = sphi 0, %s44
      %s48 = sphi 0, %s47
      %s64 = sphi 0, %s48
      %s68 = sphi 0, %s68
      %s70 = sphi 0, %s68
      %s71 = sphi 0, %s70
      %s85 = sphi 0, %s71
      %s89 = sphi 0, %s89
      %s91 = sphi 0, %s89
      %s92 = sphi 0, %s91
      %s106 = sphi 0, %s92
      %s110 = sphi 0, %s110
      %s112 = sphi 0, %s110
      %s113 = sphi 0, %s112
      %s127 = sphi 0, %s113
      %s131 = sphi 0, %s131
      %s133 = sphi 0, %s131
      %s134 = sphi 0, %s133
      %s148 = sphi 0, %s134
      %s156 = sphi 0, %s158
      %s159 = sphi 0, %s156
      %s160 = sphi 0, %s159
      %s176 = sphi 0, %s160
    $region4: #{tpu_custom_call.1} parent=1 // loop_header_branch
      %23 = sbr.rel (%p21) target = $region8
    $region5: #{tpu_custom_call.1} parent=1 // loop_body
      %s25 = ssub.s32 %s20, 1
      %s26 = ssub.s32 %s20, 2
      %s33 = sadd.s32 1, %s28
      %p34 = scmp.ge.s32.totalorder %s33, 1
      %s35 = scalar_select %p34, 0, %s33
      %s36 = sadd.s32 1, %s27
      %s37 = scalar_select %p34, %s36, %s27
      %p38 = scmp.ge.s32.totalorder %s37, 2
      %s39 = scalar_select %p38, 0, %s37
      %s40 = ssub.s32 %s27, %s39
      %s41 = ssub.s32 %s28, %s35
      %s42 = sor.u32 %s40, %s41
      %p43 = scmp.eq.s32.totalorder %s42, 0
      %s45 = sadd.s32 %s44, 1
      %s46 = scalar_select %p43, %s44, %s45
      %p49 = pneg %p43
      %p50 = scmp.eq.s32.totalorder %s20, 1
      %p51 = por %p49, %p50
      %p52 = scmp.ne.s32.totalorder %s44, %s47
      %p53 = scmp.eq.s32.totalorder %s20, 0
      %p54 = por %p52, %p53
      %p55 = scmp.ne.s32.totalorder %s44, %s47
      %p56 = scmp.eq.s32.totalorder %s25, 1
      %p57 = por %p55, %p56
      %p58 = scmp.ne.s32.totalorder %s47, %s48
      %p59 = scmp.eq.s32.totalorder %s25, 0
      %p60 = por %p58, %p59
      %p61 = scmp.ne.s32.totalorder %s47, %s48
      %p62 = scmp.eq.s32.totalorder %s26, 1
      %p63 = por %p61, %p62
      %p65 = scmp.ne.s32.totalorder %s48, %s64
      %p66 = scmp.eq.s32.totalorder %s26, 0
      %p67 = por %p65, %p66
      %s69 = sadd.s32 %s68, 1
      %p72 = scmp.eq.s32.totalorder %s20, 1
      %p73 = scmp.ne.s32.totalorder %s68, %s70
      %p74 = scmp.eq.s32.totalorder %s20, 0
      %p75 = por %p73, %p74
      %p76 = scmp.ne.s32.totalorder %s68, %s70
      %p77 = scmp.eq.s32.totalorder %s25, 1
      %p78 = por %p76, %p77
      %p79 = scmp.ne.s32.totalorder %s70, %s71
      %p80 = scmp.eq.s32.totalorder %s25, 0
      %p81 = por %p79, %p80
      %p82 = scmp.ne.s32.totalorder %s70, %s71
      %p83 = scmp.eq.s32.totalorder %s26, 1
      %p84 = por %p82, %p83
      %p86 = scmp.ne.s32.totalorder %s71, %s85
      %p87 = scmp.eq.s32.totalorder %s26, 0
      %p88 = por %p86, %p87
      %s90 = sadd.s32 %s89, 1
      %p93 = scmp.eq.s32.totalorder %s20, 1
      %p94 = scmp.ne.s32.totalorder %s89, %s91
      %p95 = scmp.eq.s32.totalorder %s20, 0
      %p96 = por %p94, %p95
      %p97 = scmp.ne.s32.totalorder %s89, %s91
      %p98 = scmp.eq.s32.totalorder %s25, 1
      %p99 = por %p97, %p98
      %p100 = scmp.ne.s32.totalorder %s91, %s92
      %p101 = scmp.eq.s32.totalorder %s25, 0
      %p102 = por %p100, %p101
      %p103 = scmp.ne.s32.totalorder %s91, %s92
      %p104 = scmp.eq.s32.totalorder %s26, 1
      %p105 = por %p103, %p104
      %p107 = scmp.ne.s32.totalorder %s92, %s106
      %p108 = scmp.eq.s32.totalorder %s26, 0
      %p109 = por %p107, %p108
      %s111 = sadd.s32 %s110, 1
      %p114 = scmp.eq.s32.totalorder %s20, 1
      %p115 = scmp.ne.s32.totalorder %s110, %s112
      %p116 = scmp.eq.s32.totalorder %s20, 0
      %p117 = por %p115, %p116
      %p118 = scmp.ne.s32.totalorder %s110, %s112
      %p119 = scmp.eq.s32.totalorder %s25, 1
      %p120 = por %p118, %p119
      %p121 = scmp.ne.s32.totalorder %s112, %s113
      %p122 = scmp.eq.s32.totalorder %s25, 0
      %p123 = por %p121, %p122
      %p124 = scmp.ne.s32.totalorder %s112, %s113
      %p125 = scmp.eq.s32.totalorder %s26, 1
      %p126 = por %p124, %p125
      %p128 = scmp.ne.s32.totalorder %s113, %s127
      %p129 = scmp.eq.s32.totalorder %s26, 0
      %p130 = por %p128, %p129
      %s132 = sadd.s32 %s131, 1
      %p135 = scmp.eq.s32.totalorder %s20, 1
      %p136 = scmp.ne.s32.totalorder %s131, %s133
      %p137 = scmp.eq.s32.totalorder %s20, 0
      %p138 = por %p136, %p137
      %p139 = scmp.ne.s32.totalorder %s131, %s133
      %p140 = scmp.eq.s32.totalorder %s25, 1
      %p141 = por %p139, %p140
      %p142 = scmp.ne.s32.totalorder %s133, %s134
      %p143 = scmp.eq.s32.totalorder %s25, 0
      %p144 = por %p142, %p143
      %p145 = scmp.ne.s32.totalorder %s133, %s134
      %p146 = scmp.eq.s32.totalorder %s26, 1
      %p147 = por %p145, %p146
      %p149 = scmp.ne.s32.totalorder %s134, %s148
      %p150 = scmp.eq.s32.totalorder %s26, 0
      %p151 = por %p149, %p150
      %s152 = ssub.s32 %s27, %s39
      %s153 = ssub.s32 %s28, %s35
      %s154 = sor.u32 %s152, %s153
      %p155 = scmp.eq.s32.totalorder %s154, 0
      %s157 = sadd.s32 %s156, 1
      %s158 = scalar_select %p155, %s156, %s157
      %p161 = pneg %p155
      %p162 = scmp.eq.s32.totalorder %s20, 1
      %p163 = por %p161, %p162
      %p164 = scmp.ne.s32.totalorder %s156, %s159
      %p165 = scmp.eq.s32.totalorder %s20, 0
      %p166 = por %p164, %p165
      %p167 = scmp.ne.s32.totalorder %s156, %s159
      %p168 = scmp.eq.s32.totalorder %s25, 1
      %p169 = por %p167, %p168
      %p170 = scmp.ne.s32.totalorder %s159, %s160
      %p171 = scmp.eq.s32.totalorder %s25, 0
      %p172 = por %p170, %p171
      %p173 = scmp.ne.s32.totalorder %s159, %s160
      %p174 = scmp.eq.s32.totalorder %s26, 1
      %p175 = por %p173, %p174
      %p177 = scmp.ne.s32.totalorder %s160, %s176
      %p178 = scmp.eq.s32.totalorder %s26, 0
      %p179 = por %p177, %p178
      %p180 = scmp.le.s32.totalorder 1, %s20
      %p181 = scmp.lt.s32.totalorder %s20, 3
      %p182 = pnand %p180, %p181
      %p183 = pneg %p182
      // Predicated region
      $region9: #{tpu_custom_call.1} parent=5 // pred_check
        _
      $region10: #{tpu_custom_call.1} parent=5 // pred_check_branch
        %185 = sbr.rel (%p182) target = $region12
      $region11: #{tpu_custom_call.1} parent=5 // pred_region
        %s186 = ssub.s32 %s20, 1
        // Predicated region
        $region13: #{tpu_custom_call.1} parent=11 // pred_check
          %p187 = pneg %p81
        $region14: #{tpu_custom_call.1} parent=11 // pred_check_branch
          %189 = sbr.rel (%p187) target = $region16
        $region15: #{tpu_custom_call.1} parent=11 // pred_region
          %s191 = ssub.s32 64, 64
          %192 = vsyncadd [#allocation5], %s191
          %s194 = sshll.u32 %s1, 4
          %s195 = int_to_ptr.vmem [resolvable:$true] %s194
          %197 = dma.vmem_to_smem %s195, 64, [#allocation6], [#allocation5]
        $region16: #{tpu_custom_call.1} parent=11 // pred_fallthru
          _
        // Predicated region
        $region17: #{tpu_custom_call.1} parent=11 // pred_check
          %p198 = pneg %p102
        $region18: #{tpu_custom_call.1} parent=11 // pred_check_branch
          %200 = sbr.rel (%p198) target = $region20
        $region19: #{tpu_custom_call.1} parent=11 // pred_region
          %s202 = ssub.s32 16, 16
          %203 = vsyncadd [#allocation8], %s202
          %s205 = sshll.u32 %s2, 4
          %s206 = int_to_ptr.vmem [resolvable:$true] %s205
          %208 = dma.vmem_to_smem %s206, 16, [#allocation7], [#allocation8]
        $region20: #{tpu_custom_call.1} parent=11 // pred_fallthru
          _
        // Predicated region
        $region21: #{tpu_custom_call.1} parent=11 // pred_check
          %p209 = pneg %p123
        $region22: #{tpu_custom_call.1} parent=11 // pred_check_branch
          %211 = sbr.rel (%p209) target = $region24
        $region23: #{tpu_custom_call.1} parent=11 // pred_region
          %s213 = ssub.s32 128, 128
          %214 = vsyncadd [#allocation8], %s213
          %s216 = sshll.u32 %s3, 4
          %s217 = int_to_ptr.vmem [resolvable:$true] %s216
          %219 = dma.vmem_to_smem %s217, 128, [#allocation9], [#allocation8]
        $region24: #{tpu_custom_call.1} parent=11 // pred_fallthru
          _
        // Predicated region
        $region25: #{tpu_custom_call.1} parent=11 // pred_check
          %p220 = pneg %p144
        $region26: #{tpu_custom_call.1} parent=11 // pred_check_branch
          %222 = sbr.rel (%p220) target = $region28
        $region27: #{tpu_custom_call.1} parent=11 // pred_region
          %s224 = ssub.s32 16, 16
          %225 = vsyncadd [#allocation11], %s224
          %s227 = sshll.u32 %s4, 4
          %s228 = int_to_ptr.vmem [resolvable:$true] %s227
          %230 = dma.vmem_to_smem %s228, 16, [#allocation10], [#allocation11]
        $region28: #{tpu_custom_call.1} parent=11 // pred_fallthru
          _
      $region12: #{tpu_custom_call.1} parent=5 // pred_fallthru
        _
      %p231 = scmp.lt.s32.totalorder %s20, 2
      // Predicated region
      $region29: #{tpu_custom_call.1} parent=5 // pred_check
        %p232 = pneg %p231
      $region30: #{tpu_custom_call.1} parent=5 // pred_check_branch
        %234 = sbr.rel (%p232) target = $region32
      $region31: #{tpu_custom_call.1} parent=5 // pred_region
        // Predicated region
        $region33: #{tpu_custom_call.1} parent=31 // pred_check
          %p235 = pneg %p54
        $region34: #{tpu_custom_call.1} parent=31 // pred_check_branch
          %237 = sbr.rel (%p235) target = $region36
        $region35: #{tpu_custom_call.1} parent=31 // pred_region
          %s238 = sand.u32 %s44, 1
          %s239 = scalar_lea.sflag [#allocation3], %s238
          %s240 = sand.u32 %s44, 1
          %s241 = smul.addr %s240, 8
          %s242 = scalar_lea.vmem [#allocation2], %s241
          %s244 = ssub.s32 128, 128
          %245 = vsyncadd %s239, %s244
          %s246 = smul.addr %s27, 4
          %s247 = sadd.s32 %s28, %s246
          %s248 = smul.addr %s247, 32
          %s249 = scalar_lea.hbm %s0, %s248
          %s250 = sshll.u32 %s242, 4
          %s251 = int_to_ptr.vmem [resolvable:$true] %s250
          %256 = dma.hbm_to_vmem [thread:$0]  %s249, 128, %s251, %s239, 32, 32, 2
        $region36: #{tpu_custom_call.1} parent=31 // pred_fallthru
          _
      $region32: #{tpu_custom_call.1} parent=5 // pred_fallthru
        _
      %p257 = scmp.le.s32.totalorder 1, %s20
      %p258 = scmp.lt.s32.totalorder %s20, 3
      %p259 = pnand %p257, %p258
      %p260 = pneg %p259
      // Predicated region
      $region37: #{tpu_custom_call.1} parent=5 // pred_check
        _
      $region38: #{tpu_custom_call.1} parent=5 // pred_check_branch
        %262 = sbr.rel (%p259) target = $region40
      $region39: #{tpu_custom_call.1} parent=5 // pred_region
        %s263 = ssub.s32 %s20, 1
        %s264 = sand.u32 %s47, 1
        %s265 = scalar_lea.sflag [#allocation3], %s264
        %s266 = sand.u32 %s47, 1
        %s267 = smul.addr %s266, 8
        %s268 = scalar_lea.vmem [#allocation2], %s267
        // Predicated region
        $region41: #{tpu_custom_call.1} parent=39 // pred_check
          %p269 = pneg %p60
        $region42: #{tpu_custom_call.1} parent=39 // pred_check_branch
          %271 = sbr.rel (%p269) target = $region44
        $region43: #{tpu_custom_call.1} parent=39 // pred_region
          %272 = dma.done %s265, 128
        $region44: #{tpu_custom_call.1} parent=39 // pred_fallthru
          _
        // Predicated region
        $region45: #{tpu_custom_call.1} parent=39 // pred_check
          %p273 = pneg %p81
        $region46: #{tpu_custom_call.1} parent=39 // pred_check_branch
          %275 = sbr.rel (%p273) target = $region48
        $region47: #{tpu_custom_call.1} parent=39 // pred_region
          %276 = dma.done [#allocation5], 64
        $region48: #{tpu_custom_call.1} parent=39 // pred_fallthru
          _
        // Predicated region
        $region49: #{tpu_custom_call.1} parent=39 // pred_check
          %p277 = pneg %p102
        $region50: #{tpu_custom_call.1} parent=39 // pred_check_branch
          %279 = sbr.rel (%p277) target = $region52
        $region51: #{tpu_custom_call.1} parent=39 // pred_region
          %280 = dma.done [#allocation8], 16
        $region52: #{tpu_custom_call.1} parent=39 // pred_fallthru
          _
        // Predicated region
        $region53: #{tpu_custom_call.1} parent=39 // pred_check
          %p281 = pneg %p123
        $region54: #{tpu_custom_call.1} parent=39 // pred_check_branch
          %283 = sbr.rel (%p281) target = $region56
        $region55: #{tpu_custom_call.1} parent=39 // pred_region
          %284 = dma.done [#allocation8], 128
        $region56: #{tpu_custom_call.1} parent=39 // pred_fallthru
          _
        // Predicated region
        $region57: #{tpu_custom_call.1} parent=39 // pred_check
          %p285 = pneg %p144
        $region58: #{tpu_custom_call.1} parent=39 // pred_check_branch
          %287 = sbr.rel (%p285) target = $region60
        $region59: #{tpu_custom_call.1} parent=39 // pred_region
          %288 = dma.done [#allocation11], 16
        $region60: #{tpu_custom_call.1} parent=39 // pred_fallthru
          _
        %289 = sfence
        %s290 = sand.u32 %s47, 1
        %s291 = scalar_lea.sflag [#allocation3], %s290
        %s292 = sand.u32 %s47, 1
        %s293 = smul.addr %s292, 8
        %s294 = scalar_lea.vmem [#allocation2], %s293
        %p295 = pneg %p60
        %p296 = pneg %p57
        %p297 = pneg %p81
        %p298 = pneg %p78
        %p299 = pneg %p102
        %p300 = pneg %p99
        %p301 = pneg %p123
        %p302 = pneg %p120
        %p303 = pneg %p144
        %p304 = pneg %p141
        %p305 = pneg %p172
        %p306 = pneg %p169
        %s307 = sand.u32 %s159, 1
        %s308 = scalar_lea.sflag [#allocation4], %s307
        %s309 = sand.u32 %s159, 1
        %s310 = smul.addr %s309, 6
        %s311 = scalar_lea.vmem [#allocation12], %s310
        %v312 = vld [vmem:[%s268] sm:$0x3]
        %s313 = scalar_lea.vmem %s268, 2 [#allocation2]
        %v314 = vld [vmem:[%s313] sm:$0x3]
        %s315 = scalar_lea.vmem %s268, 4 [#allocation2]
        %v316 = vld [vmem:[%s315] sm:$0x3]
        %s317 = scalar_lea.vmem %s268, 6 [#allocation2]
        %v318 = vld [vmem:[%s317] sm:$0x3]
        %s319 = sld [smem:[#allocation6]]
        %v320 = vstv %s319
        %v321 = vmul.f32 %v312, %v320
        %s322 = sld [smem:[#allocation6 + $0x80]]
        %v323 = vstv %s322
        %v324 = vmul.f32 %v314, %v323
        %v325 = vadd.f32 %v321, %v324
        %s326 = sld [smem:[#allocation6 + $0x100]]
        %v327 = vstv %s326
        %v328 = vmul.f32 %v316, %v327
        %v329 = vadd.f32 %v325, %v328
        %s330 = sld [smem:[#allocation6 + $0x180]]
        %v331 = vstv %s330
        %v332 = vmul.f32 %v318, %v331
        %v333 = vadd.f32 %v329, %v332
        %s334 = sld [smem:[#allocation7]]
        %v335 = vstv %s334
        %v336 = vadd.f32 %v333, %v335
        %v337 = vmax.f32 %v336, 0.0
        %s338 = sld [smem:[#allocation6 + $0x1]]
        %v339 = vstv %s338
        %v340 = vmul.f32 %v312, %v339
        %s341 = sld [smem:[#allocation6 + $0x81]]
        %v342 = vstv %s341
        %v343 = vmul.f32 %v314, %v342
        %v344 = vadd.f32 %v340, %v343
        %s345 = sld [smem:[#allocation6 + $0x101]]
        %v346 = vstv %s345
        %v347 = vmul.f32 %v316, %v346
        %v348 = vadd.f32 %v344, %v347
        %s349 = sld [smem:[#allocation6 + $0x181]]
        %v350 = vstv %s349
        %v351 = vmul.f32 %v318, %v350
        %v352 = vadd.f32 %v348, %v351
        %s353 = sld [smem:[#allocation7 + $0x1]]
        %v354 = vstv %s353
        %v355 = vadd.f32 %v352, %v354
        %v356 = vmax.f32 %v355, 0.0
        %s357 = sld [smem:[#allocation6 + $0x2]]
        %v358 = vstv %s357
        %v359 = vmul.f32 %v312, %v358
        %s360 = sld [smem:[#allocation6 + $0x82]]
        %v361 = vstv %s360
        %v362 = vmul.f32 %v314, %v361
        %v363 = vadd.f32 %v359, %v362
        %s364 = sld [smem:[#allocation6 + $0x102]]
        %v365 = vstv %s364
        %v366 = vmul.f32 %v316, %v365
        %v367 = vadd.f32 %v363, %v366
        %s368 = sld [smem:[#allocation6 + $0x182]]
        %v369 = vstv %s368
        %v370 = vmul.f32 %v318, %v369
        %v371 = vadd.f32 %v367, %v370
        %s372 = sld [smem:[#allocation7 + $0x2]]
        %v373 = vstv %s372
        %v374 = vadd.f32 %v371, %v373
        %v375 = vmax.f32 %v374, 0.0
        %s376 = sld [smem:[#allocation6 + $0x3]]
        %v377 = vstv %s376
        %v378 = vmul.f32 %v312, %v377
        %s379 = sld [smem:[#allocation6 + $0x83]]
        %v380 = vstv %s379
        %v381 = vmul.f32 %v314, %v380
        %v382 = vadd.f32 %v378, %v381
        %s383 = sld [smem:[#allocation6 + $0x103]]
        %v384 = vstv %s383
        %v385 = vmul.f32 %v316, %v384
        %v386 = vadd.f32 %v382, %v385
        %s387 = sld [smem:[#allocation6 + $0x183]]
        %v388 = vstv %s387
        %v389 = vmul.f32 %v318, %v388
        %v390 = vadd.f32 %v386, %v389
        %s391 = sld [smem:[#allocation7 + $0x3]]
        %v392 = vstv %s391
        %v393 = vadd.f32 %v390, %v392
        %v394 = vmax.f32 %v393, 0.0
        %s395 = sld [smem:[#allocation6 + $0x4]]
        %v396 = vstv %s395
        %v397 = vmul.f32 %v312, %v396
        %s398 = sld [smem:[#allocation6 + $0x84]]
        %v399 = vstv %s398
        %v400 = vmul.f32 %v314, %v399
        %v401 = vadd.f32 %v397, %v400
        %s402 = sld [smem:[#allocation6 + $0x104]]
        %v403 = vstv %s402
        %v404 = vmul.f32 %v316, %v403
        %v405 = vadd.f32 %v401, %v404
        %s406 = sld [smem:[#allocation6 + $0x184]]
        %v407 = vstv %s406
        %v408 = vmul.f32 %v318, %v407
        %v409 = vadd.f32 %v405, %v408
        %s410 = sld [smem:[#allocation7 + $0x4]]
        %v411 = vstv %s410
        %v412 = vadd.f32 %v409, %v411
        %v413 = vmax.f32 %v412, 0.0
        %s414 = sld [smem:[#allocation9]]
        %v415 = vstv %s414
        %v416 = vmul.f32 %v337, %v415
        %s417 = sld [smem:[#allocation9 + $0x80]]
        %v418 = vstv %s417
        %v419 = vmul.f32 %v356, %v418
        %v420 = vadd.f32 %v416, %v419
        %s421 = sld [smem:[#allocation9 + $0x100]]
        %v422 = vstv %s421
        %v423 = vmul.f32 %v375, %v422
        %v424 = vadd.f32 %v420, %v423
        %s425 = sld [smem:[#allocation9 + $0x180]]
        %v426 = vstv %s425
        %v427 = vmul.f32 %v394, %v426
        %v428 = vadd.f32 %v424, %v427
        %s429 = sld [smem:[#allocation9 + $0x200]]
        %v430 = vstv %s429
        %v431 = vmul.f32 %v413, %v430
        %v432 = vadd.f32 %v428, %v431
        %s433 = sld [smem:[#allocation10]]
        %v434 = vstv %s433
        %v435 = vadd.f32 %v432, %v434
        %436 = vst [vmem:[%s311] sm:$0x3] %v435
        %s437 = sld [smem:[#allocation9 + $0x1]]
        %v438 = vstv %s437
        %v439 = vmul.f32 %v337, %v438
        %s440 = sld [smem:[#allocation9 + $0x81]]
        %v441 = vstv %s440
        %v442 = vmul.f32 %v356, %v441
        %v443 = vadd.f32 %v439, %v442
        %s444 = sld [smem:[#allocation9 + $0x101]]
        %v445 = vstv %s444
        %v446 = vmul.f32 %v375, %v445
        %v447 = vadd.f32 %v443, %v446
        %s448 = sld [smem:[#allocation9 + $0x181]]
        %v449 = vstv %s448
        %v450 = vmul.f32 %v394, %v449
        %v451 = vadd.f32 %v447, %v450
        %s452 = sld [smem:[#allocation9 + $0x201]]
        %v453 = vstv %s452
        %v454 = vmul.f32 %v413, %v453
        %v455 = vadd.f32 %v451, %v454
        %s456 = sld [smem:[#allocation10 + $0x1]]
        %v457 = vstv %s456
        %v458 = vadd.f32 %v455, %v457
        %s459 = scalar_lea.vmem %s311, 2 [#allocation12]
        %460 = vst [vmem:[%s459] sm:$0x3] %v458
        %s461 = sld [smem:[#allocation9 + $0x2]]
        %v462 = vstv %s461
        %v463 = vmul.f32 %v337, %v462
        %s464 = sld [smem:[#allocation9 + $0x82]]
        %v465 = vstv %s464
        %v466 = vmul.f32 %v356, %v465
        %v467 = vadd.f32 %v463, %v466
        %s468 = sld [smem:[#allocation9 + $0x102]]
        %v469 = vstv %s468
        %v470 = vmul.f32 %v375, %v469
        %v471 = vadd.f32 %v467, %v470
        %s472 = sld [smem:[#allocation9 + $0x182]]
        %v473 = vstv %s472
        %v474 = vmul.f32 %v394, %v473
        %v475 = vadd.f32 %v471, %v474
        %s476 = sld [smem:[#allocation9 + $0x202]]
        %v477 = vstv %s476
        %v478 = vmul.f32 %v413, %v477
        %v479 = vadd.f32 %v475, %v478
        %s480 = sld [smem:[#allocation10 + $0x2]]
        %v481 = vstv %s480
        %v482 = vadd.f32 %v479, %v481
        %s483 = scalar_lea.vmem %s311, 4 [#allocation12]
        %484 = vst [vmem:[%s483] sm:$0x3] %v482
        %s485 = sand.u32 %s159, 1
        %s486 = scalar_lea.sflag [#allocation4], %s485
        %s487 = sand.u32 %s159, 1
        %s488 = smul.addr %s487, 6
        %s489 = scalar_lea.vmem [#allocation12], %s488
        // Predicated region
        $region61: #{tpu_custom_call.1} parent=39 // pred_check
          %p490 = pneg %p169
        $region62: #{tpu_custom_call.1} parent=39 // pred_check_branch
          %492 = sbr.rel (%p490) target = $region64
        $region63: #{tpu_custom_call.1} parent=39 // pred_region
          %s494 = ssub.s32 96, 96
          %495 = vsyncadd %s486, %s494
          %s496 = smul.addr %s29, 3
          %s497 = sadd.s32 %s30, %s496
          %s498 = smul.addr %s497, 32
          %s499 = scalar_lea.hbm %s5, %s498
          %s500 = sshll.u32 %s489, 4
          %s501 = int_to_ptr.vmem [resolvable:$true] %s500
          %506 = dma.vmem_to_hbm [thread:$0]  %s501, 96, %s499, %s486, 32, 32, 2
        $region64: #{tpu_custom_call.1} parent=39 // pred_fallthru
          _
      $region40: #{tpu_custom_call.1} parent=5 // pred_fallthru
        _
      %p507 = scmp.le.s32.totalorder 2, %s20
      // Predicated region
      $region65: #{tpu_custom_call.1} parent=5 // pred_check
        %p508 = pneg %p507
      $region66: #{tpu_custom_call.1} parent=5 // pred_check_branch
        %510 = sbr.rel (%p508) target = $region68
      $region67: #{tpu_custom_call.1} parent=5 // pred_region
        %s511 = ssub.s32 %s20, 2
        // Predicated region
        $region69: #{tpu_custom_call.1} parent=67 // pred_check
          %p512 = pneg %p175
        $region70: #{tpu_custom_call.1} parent=67 // pred_check_branch
          %514 = sbr.rel (%p512) target = $region72
        $region71: #{tpu_custom_call.1} parent=67 // pred_region
          %s515 = sand.u32 %s160, 1
          %s516 = scalar_lea.sflag [#allocation4], %s515
          %s517 = sand.u32 %s160, 1
          %s518 = smul.addr %s517, 6
          %s519 = scalar_lea.vmem [#allocation12], %s518
          %520 = dma.done %s516, 96
        $region72: #{tpu_custom_call.1} parent=67 // pred_fallthru
          _
      $region68: #{tpu_custom_call.1} parent=5 // pred_fallthru
        _
    $region6: #{tpu_custom_call.1} parent=1 // loop_footer
      %s24 = sadd.s32 1, %s20
    $region7: #{tpu_custom_call.1} parent=1 // loop_footer_branch
      %19 = sbr.rel target = $region3
    $region8: #{tpu_custom_call.1} parent=1 // loop_exit
      _
    %521 = vsyncpa [#allocation3], 1
    %s522 = scalar_lea.sflag [#allocation3], 1
    %523 = vsyncpa %s522, 1
    %524 = vsyncpa [#allocation4], 1
    %s525 = scalar_lea.sflag [#allocation4], 1
    %526 = vsyncpa %s525, 1
    %527 = vsyncpa [#allocation5], 1
    %s528 = scalar_lea.sflag [#allocation5], 1
    %529 = vsyncpa %s528, 1
    %530 = vsyncpa [#allocation8], 1
    %531 = vsyncpa [#allocation11], 1

</llo_original>
